<compile_context>
chip_gen: v5e
topology: v5e:2x2
jax: 0.10.0
libtpu: 0.0.40
codegen_flags: <defaults>
</compile_context>

<pallas_src>
import numpy as np
import jax
import jax.numpy as jnp
from jax.experimental import pallas as pl
from jax.experimental.pallas import tpu as pltpu

WIN_SIZE = 11
WIN_SIGMA = 1.5
K1, K2 = 0.01, 0.03


def _gaussian_window(size, sigma):
    coords = np.arange(size, dtype=np.float64) - size // 2
    g = np.exp(-(coords ** 2) / (2.0 * sigma ** 2))
    g /= g.sum()
    return g.astype(np.float32)


def _banded_filter_matrices(H, W):
    """Constant banded matrices so the separable conv becomes two matmuls."""
    win = _gaussian_window(WIN_SIZE, WIN_SIGMA)
    Hout, Wout = H - WIN_SIZE + 1, W - WIN_SIZE + 1
    ah = np.zeros((Hout, H), dtype=np.float32)       # out[o,:] = sum_h Ah[o,h] img[h,:]
    for o in range(Hout):
        ah[o, o:o + WIN_SIZE] = win
    aw = np.zeros((W, Wout), dtype=np.float32)       # out[:,q] = sum_w img[:,w] Aw[w,q]
    for q in range(Wout):
        aw[q:q + WIN_SIZE, q] = win
    return ah, aw


def make_ssim_loss(B, C, H, W, max_value=1.0):
    assert H >= WIN_SIZE and W >= WIN_SIZE
    BC = B * C
    Hout, Wout = H - WIN_SIZE + 1, W - WIN_SIZE + 1
    C1 = float((K1 * max_value) ** 2)
    C2 = float((K2 * max_value) ** 2)
    inv_area = float(1.0 / (Hout * Wout))

    ah_np, aw_np = _banded_filter_matrices(H, W)
    ah_const = jnp.asarray(ah_np)                    # (Hout, H)
    aw_const = jnp.asarray(aw_np)                    # (W, Wout)

    def kernel(sr_ref, hr_ref, ah_ref, aw_ref, out_ref):
        # one (batch, channel) slab per grid step
        x = sr_ref[0].astype(jnp.float32)            # (H, W)
        y = hr_ref[0].astype(jnp.float32)
        ah = ah_ref[...]                             # (Hout, H)
        aw = aw_ref[...]                             # (W, Wout)

        def gfilt(img):
            # separable 'valid' Gaussian filter as two MXU matmuls
            t = jnp.dot(img, aw, preferred_element_type=jnp.float32)   # (H, Wout)
            return jnp.dot(ah, t, preferred_element_type=jnp.float32)  # (Hout, Wout)

        mu1 = gfilt(x)
        mu2 = gfilt(y)
        mu1_sq = mu1 * mu1
        mu2_sq = mu2 * mu2
        mu1_mu2 = mu1 * mu2
        sxx = gfilt(x * x) - mu1_sq                  # compensation == 1.0
        syy = gfilt(y * y) - mu2_sq
        sxy = gfilt(x * y) - mu1_mu2

        cs_map = (2.0 * sxy + C2) / (sxx + syy + C2)
        ssim_map = ((2.0 * mu1_mu2 + C1) / (mu1_sq + mu2_sq + C1)) * cs_map

        ssim_val = jnp.sum(ssim_map) * inv_area      # spatial mean for this (b, c)
        # lane-dense (8,128) tile per grid step; wrapper reads [:, 0, 0]
        out_ref[...] = jnp.full((1, 8, 128), ssim_val, dtype=jnp.float32)

    # --- scheduling hints ----------------------------------------------------
    matmul_flops = 5 * 2 * (H * W * Wout + Hout * H * Wout)     # per (b, c) slab
    flops = int(BC * (matmul_flops + 20 * Hout * Wout))
    bytes_accessed = int(2 * BC * H * W * 4 + (Hout * H + W * Wout) * 4
                         + BC * 8 * 128 * 4)
    cost = pl.CostEstimate(flops=flops, transcendentals=0,
                           bytes_accessed=bytes_accessed)

    per_img = H * W * 4
    est = (2 * 2 * per_img                 # double-buffered sr/hr blocks
           + 3 * per_img                   # x*x, y*y, x*y
           + 5 * H * Wout * 4              # W-filtered temporaries
           + 10 * Hout * Wout * 4          # filtered maps + ssim temps
           + (Hout * H + W * Wout) * 4)    # banded matrices
    vmem_limit = int(min(64 * 1024 * 1024, max(32 * 1024 * 1024, 2 * est)))

    fn = pl.pallas_call(
        kernel,
        out_shape=jax.ShapeDtypeStruct((BC, 8, 128), jnp.float32),
        grid_spec=pltpu.PrefetchScalarGridSpec(
            num_scalar_prefetch=0,
            grid=(BC,),
            in_specs=[
                pl.BlockSpec((1, H, W), lambda i: (i, 0, 0)),     # sr slab
                pl.BlockSpec((1, H, W), lambda i: (i, 0, 0)),     # hr slab
                pl.BlockSpec((Hout, H), lambda i: (0, 0)),        # Ah (resident)
                pl.BlockSpec((W, Wout), lambda i: (0, 0)),        # Aw (resident)
            ],
            out_specs=pl.BlockSpec((1, 8, 128), lambda i: (i, 0, 0)),
        ),
        compiler_params=pltpu.CompilerParams(
            dimension_semantics=("parallel",),
            vmem_limit_bytes=vmem_limit),
        cost_estimate=cost,
    )

    def ssim_loss(sr, hr):
        # no dtype cast here: native dtype goes over HBM, kernel accumulates f32
        sr_f = sr.reshape(BC, H, W)
        hr_f = hr.reshape(BC, H, W)
        per_channel = fn(sr_f, hr_f, ah_const, aw_const)[:, 0, 0]   # (B*C,)
        ssim_per_image = per_channel.reshape(B, C).mean(axis=1)     # size_average=False
        return 1.0 - ssim_per_image.mean()

    return ssim_loss


def _ssim_loss_ref(sr, hr, max_value=1.0):
    # pure-JAX reference (same math as pytorch_msssim), for validation only
    B, C, H, W = sr.shape
    win = jnp.asarray(_gaussian_window(WIN_SIZE, WIN_SIGMA))
    Hout, Wout = H - WIN_SIZE + 1, W - WIN_SIZE + 1
    C1 = (K1 * max_value) ** 2
    C2 = (K2 * max_value) ** 2

    def gfilt(img):  # img: (B, C, H, W)
        t = sum(win[k] * img[:, :, k:k + Hout, :] for k in range(WIN_SIZE))
        o = sum(win[k] * t[:, :, :, k:k + Wout] for k in range(WIN_SIZE))
        return o

    x = sr.astype(jnp.float32)
    y = hr.astype(jnp.float32)
    mu1, mu2 = gfilt(x), gfilt(y)
    s11 = gfilt(x * x) - mu1 * mu1
    s22 = gfilt(y * y) - mu2 * mu2
    s12 = gfilt(x * y) - mu1 * mu2
    cs = (2 * s12 + C2) / (s11 + s22 + C2)
    ssim_map = ((2 * mu1 * mu2 + C1) / (mu1 * mu1 + mu2 * mu2 + C1)) * cs
    per_channel = ssim_map.reshape(B, C, -1).mean(-1)    # (B, C)
    ssim_val = per_channel.mean(1)                       # (B,)  size_average=False
    return 1.0 - ssim_val.mean()


if __name__ == "__main__":
    B, C, H, W = 2, 3, 16, 16   # channel=3 as in SSIM(..., channel=3)
    key = jax.random.PRNGKey(0)
    k_sr, k_hr = jax.random.split(key)
    sr = jax.random.uniform(k_sr, (B, C, H, W), dtype=jnp.float32)  # data_range=1.0
    hr = jax.random.uniform(k_hr, (B, C, H, W), dtype=jnp.float32)

    ssim_loss = make_ssim_loss(B, C, H, W, max_value=1.0)
    out = ssim_loss(sr, hr)
    jax.block_until_ready(out)

    ref = _ssim_loss_ref(sr, hr, max_value=1.0)
    assert jnp.allclose(out, ref, atol=1e-5), (out, ref)
    print("KERNEL_OK")
</pallas_src>

<mosaic_0001>
module attributes {stable_mosaic.version = 11 : i64} {
  func.func @kernel(%arg0: i32, %arg1: memref<1x16x16xf32, #tpu.memory_space<vmem>>, %arg2: memref<1x16x16xf32, #tpu.memory_space<vmem>>, %arg3: memref<6x16xf32, #tpu.memory_space<vmem>>, %arg4: memref<16x6xf32, #tpu.memory_space<vmem>>, %arg5: memref<1x8x128xf32, #tpu.memory_space<vmem>>) attributes {dimension_semantics = [#tpu.dimension_semantics<parallel>], iteration_bounds = array<i64: 6>, scalar_prefetch = 0 : i64, scratch_operands = 0 : i64, tpu.core_type = #tpu.core_type<tc>, window_params = [{transform_indices = @transform_0, window_bounds = array<i64: 1, 16, 16>}, {transform_indices = @transform_1, window_bounds = array<i64: 1, 16, 16>}, {pipeline_mode = #tpu.pipeline_mode<synchronous>, transform_indices = @transform_2, window_bounds = array<i64: 6, 16>}, {pipeline_mode = #tpu.pipeline_mode<synchronous>, transform_indices = @transform_3, window_bounds = array<i64: 16, 6>}, {transform_indices = @transform_4, window_bounds = array<i64: 1, 8, 128>}]} {
    %c0 = arith.constant 0 : index
    %c0_0 = arith.constant 0 : index
    %c0_1 = arith.constant 0 : index
    %0 = vector.load %arg1[%c0, %c0_0, %c0_1] : memref<1x16x16xf32, #tpu.memory_space<vmem>>, vector<1x16x16xf32>
    %1 = vector.shape_cast %0 : vector<1x16x16xf32> to vector<16x16xf32>
    %c0_2 = arith.constant 0 : index
    %c0_3 = arith.constant 0 : index
    %c0_4 = arith.constant 0 : index
    %2 = vector.load %arg2[%c0_2, %c0_3, %c0_4] : memref<1x16x16xf32, #tpu.memory_space<vmem>>, vector<1x16x16xf32>
    %3 = vector.shape_cast %2 : vector<1x16x16xf32> to vector<16x16xf32>
    %c0_5 = arith.constant 0 : index
    %c0_6 = arith.constant 0 : index
    %4 = vector.load %arg3[%c0_5, %c0_6] : memref<6x16xf32, #tpu.memory_space<vmem>>, vector<6x16xf32>
    %c0_7 = arith.constant 0 : index
    %c0_8 = arith.constant 0 : index
    %5 = vector.load %arg4[%c0_7, %c0_8] : memref<16x6xf32, #tpu.memory_space<vmem>>, vector<16x6xf32>
    %cst = arith.constant dense<0.000000e+00> : vector<16x6xf32>
    %6 = tpu.matmul %1, %5, %cst {dimension_numbers = #tpu.dot_dimension_numbers<[1], [0], [0], [1], [0, 0, 1, 1], [], []>} : vector<16x16xf32>, vector<16x6xf32>, vector<16x6xf32> -> vector<16x6xf32>
    %cst_9 = arith.constant dense<0.000000e+00> : vector<6x6xf32>
    %7 = tpu.matmul %4, %6, %cst_9 {dimension_numbers = #tpu.dot_dimension_numbers<[1], [0], [0], [1], [0, 0, 1, 1], [], []>} : vector<6x16xf32>, vector<16x6xf32>, vector<6x6xf32> -> vector<6x6xf32>
    %cst_10 = arith.constant dense<0.000000e+00> : vector<16x6xf32>
    %8 = tpu.matmul %3, %5, %cst_10 {dimension_numbers = #tpu.dot_dimension_numbers<[1], [0], [0], [1], [0, 0, 1, 1], [], []>} : vector<16x16xf32>, vector<16x6xf32>, vector<16x6xf32> -> vector<16x6xf32>
    %cst_11 = arith.constant dense<0.000000e+00> : vector<6x6xf32>
    %9 = tpu.matmul %4, %8, %cst_11 {dimension_numbers = #tpu.dot_dimension_numbers<[1], [0], [0], [1], [0, 0, 1, 1], [], []>} : vector<6x16xf32>, vector<16x6xf32>, vector<6x6xf32> -> vector<6x6xf32>
    %10 = arith.mulf %7, %7 : vector<6x6xf32>
    %11 = arith.mulf %9, %9 : vector<6x6xf32>
    %12 = arith.mulf %7, %9 : vector<6x6xf32>
    %13 = arith.mulf %1, %1 : vector<16x16xf32>
    %cst_12 = arith.constant dense<0.000000e+00> : vector<16x6xf32>
    %14 = tpu.matmul %13, %5, %cst_12 {dimension_numbers = #tpu.dot_dimension_numbers<[1], [0], [0], [1], [0, 0, 1, 1], [], []>} : vector<16x16xf32>, vector<16x6xf32>, vector<16x6xf32> -> vector<16x6xf32>
    %cst_13 = arith.constant dense<0.000000e+00> : vector<6x6xf32>
    %15 = tpu.matmul %4, %14, %cst_13 {dimension_numbers = #tpu.dot_dimension_numbers<[1], [0], [0], [1], [0, 0, 1, 1], [], []>} : vector<6x16xf32>, vector<16x6xf32>, vector<6x6xf32> -> vector<6x6xf32>
    %16 = arith.subf %15, %10 : vector<6x6xf32>
    %17 = arith.mulf %3, %3 : vector<16x16xf32>
    %cst_14 = arith.constant dense<0.000000e+00> : vector<16x6xf32>
    %18 = tpu.matmul %17, %5, %cst_14 {dimension_numbers = #tpu.dot_dimension_numbers<[1], [0], [0], [1], [0, 0, 1, 1], [], []>} : vector<16x16xf32>, vector<16x6xf32>, vector<16x6xf32> -> vector<16x6xf32>
    %cst_15 = arith.constant dense<0.000000e+00> : vector<6x6xf32>
    %19 = tpu.matmul %4, %18, %cst_15 {dimension_numbers = #tpu.dot_dimension_numbers<[1], [0], [0], [1], [0, 0, 1, 1], [], []>} : vector<6x16xf32>, vector<16x6xf32>, vector<6x6xf32> -> vector<6x6xf32>
    %20 = arith.subf %19, %11 : vector<6x6xf32>
    %21 = arith.mulf %1, %3 : vector<16x16xf32>
    %cst_16 = arith.constant dense<0.000000e+00> : vector<16x6xf32>
    %22 = tpu.matmul %21, %5, %cst_16 {dimension_numbers = #tpu.dot_dimension_numbers<[1], [0], [0], [1], [0, 0, 1, 1], [], []>} : vector<16x16xf32>, vector<16x6xf32>, vector<16x6xf32> -> vector<16x6xf32>
    %cst_17 = arith.constant dense<0.000000e+00> : vector<6x6xf32>
    %23 = tpu.matmul %4, %22, %cst_17 {dimension_numbers = #tpu.dot_dimension_numbers<[1], [0], [0], [1], [0, 0, 1, 1], [], []>} : vector<6x16xf32>, vector<16x6xf32>, vector<6x6xf32> -> vector<6x6xf32>
    %24 = arith.subf %23, %12 : vector<6x6xf32>
    %cst_18 = arith.constant 2.000000e+00 : f32
    %25 = vector.broadcast %cst_18 : f32 to vector<6x6xf32>
    %26 = arith.mulf %25, %24 : vector<6x6xf32>
    %cst_19 = arith.constant 8.99999984E-4 : f32
    %27 = vector.broadcast %cst_19 : f32 to vector<6x6xf32>
    %28 = arith.addf %26, %27 : vector<6x6xf32>
    %29 = arith.addf %16, %20 : vector<6x6xf32>
    %cst_20 = arith.constant 8.99999984E-4 : f32
    %30 = vector.broadcast %cst_20 : f32 to vector<6x6xf32>
    %31 = arith.addf %29, %30 : vector<6x6xf32>
    %32 = arith.divf %28, %31 : vector<6x6xf32>
    %cst_21 = arith.constant 2.000000e+00 : f32
    %33 = vector.broadcast %cst_21 : f32 to vector<6x6xf32>
    %34 = arith.mulf %33, %12 : vector<6x6xf32>
    %cst_22 = arith.constant 9.99999974E-5 : f32
    %35 = vector.broadcast %cst_22 : f32 to vector<6x6xf32>
    %36 = arith.addf %34, %35 : vector<6x6xf32>
    %37 = arith.addf %10, %11 : vector<6x6xf32>
    %cst_23 = arith.constant 9.99999974E-5 : f32
    %38 = vector.broadcast %cst_23 : f32 to vector<6x6xf32>
    %39 = arith.addf %37, %38 : vector<6x6xf32>
    %40 = arith.divf %36, %39 : vector<6x6xf32>
    %41 = arith.mulf %40, %32 : vector<6x6xf32>
    %42 = vector.shape_cast %41 : vector<6x6xf32> to vector<1x6x6xf32>
    %cst_24 = arith.constant dense<0.000000e+00> : vector<1xf32>
    %43 = vector.multi_reduction <add>, %42, %cst_24 [1, 2] : vector<1x6x6xf32> to vector<1xf32>
    %44 = vector.shape_cast %43 : vector<1xf32> to vector<1x1x1xf32>
    %45 = vector.extract %44[0, 0, 0] : f32 from vector<1x1x1xf32>
    %cst_25 = arith.constant 0.027777778 : f32
    %46 = arith.mulf %45, %cst_25 : f32
    %47 = vector.broadcast %46 : f32 to vector<1x8x128xf32>
    %c0_26 = arith.constant 0 : index
    %c0_27 = arith.constant 0 : index
    %c0_28 = arith.constant 0 : index
    %48 = vector.load %arg5[%c0_26, %c0_27, %c0_28] : memref<1x8x128xf32, #tpu.memory_space<vmem>>, vector<1x8x128xf32>
    tpu.vector_store %arg5[%c0_26, %c0_27, %c0_28], %47 {strides = array<i32>} : memref<1x8x128xf32, #tpu.memory_space<vmem>>, vector<1x8x128xf32>,
    return
  }
  func.func @transform_0(%arg0: i32) -> (i32, i32, i32) {
    %c0_i32 = arith.constant 0 : i32
    %c0_i32_0 = arith.constant 0 : i32
    %c0_i32_1 = arith.constant 0 : i32
    return %arg0, %c0_i32, %c0_i32_0 : i32, i32, i32
  }
  func.func @transform_1(%arg0: i32) -> (i32, i32, i32) {
    %c0_i32 = arith.constant 0 : i32
    %c0_i32_0 = arith.constant 0 : i32
    %c0_i32_1 = arith.constant 0 : i32
    return %arg0, %c0_i32, %c0_i32_0 : i32, i32, i32
  }
  func.func @transform_2(%arg0: i32) -> (i32, i32) {
    %c0_i32 = arith.constant 0 : i32
    %c0_i32_0 = arith.constant 0 : i32
    %c0_i32_1 = arith.constant 0 : i32
    return %c0_i32, %c0_i32_0 : i32, i32
  }
  func.func @transform_3(%arg0: i32) -> (i32, i32) {
    %c0_i32 = arith.constant 0 : i32
    %c0_i32_0 = arith.constant 0 : i32
    %c0_i32_1 = arith.constant 0 : i32
    return %c0_i32, %c0_i32_0 : i32, i32
  }
  func.func @transform_4(%arg0: i32) -> (i32, i32, i32) {
    %c0_i32 = arith.constant 0 : i32
    %c0_i32_0 = arith.constant 0 : i32
    %c0_i32_1 = arith.constant 0 : i32
    return %arg0, %c0_i32, %c0_i32_0 : i32, i32, i32
  }
}

</mosaic_0001>

<llo_original>
// kernel: tpu_custom_call.1
$region0: #{tpu_custom_call.1}
  #allocation0 [shape = 'u32[]', space=smem, size = 0x4, offset = 0x4, fixed_abs, tag = 'smem constant byte address 0x4 - core index']
  #allocation1 [shape = 'u32[72,128]{1,0:T(1,128)}', space=vmem, size = 0x9000, scoped, tag = 'internal scratch']
  %s0 = inlined_call_operand.hbm [shape: f32[6,16,16], index: 0, kind: input, shape index: {}]
  %s1 = inlined_call_operand.hbm [shape: f32[6,16,16], index: 1, kind: input, shape index: {}]
  %s2 = inlined_call_operand.vmem [shape: f32[6,16], index: 2, kind: input, shape index: {}]
  %s3 = inlined_call_operand.vmem [shape: f32[16,6], index: 3, kind: input, shape index: {}]
  %s4 = inlined_call_operand.hbm [shape: f32[6,8,128], index: 4, kind: output, shape index: {}]
  %s5 = sld [smem:[#allocation0]]
  $region57: #{tpu_custom_call.1} parent=0
    _
  %s7 = ssub.s32 1, %s5
  %s8 = scalar_select 0, %s7, %s5
  $region1: #{tpu_custom_call.1} parent=0
    #allocation2 [shape = 'u8[16384]{0}', space=vmem, size = 0x4000, scoped, tag = 'input window, operand 0']
    #allocation3 [shape = 's32[2]{0}', space=sflag, size = 0x8, scoped, tag = 'scoped memory for tpu_custom_call.1']
    #allocation4 [shape = 's32[2]{0}', space=sflag, size = 0x8, scoped, tag = 'scoped memory for tpu_custom_call.1']
    #allocation5 [shape = 'u8[16384]{0}', space=vmem, size = 0x4000, scoped, tag = 'input window, operand 1']
    #allocation6 [shape = 's32[2]{0}', space=sflag, size = 0x8, scoped, tag = 'scoped memory for tpu_custom_call.1']
    #allocation7 [shape = 'u8[8192]{0}', space=vmem, size = 0x2000, scoped, tag = 'output window, operand 0']
    %9 = vsyncpa [#allocation3], 0
    %s10 = scalar_lea.sflag [#allocation3], 1
    %11 = vsyncpa %s10, 0
    %12 = vsyncpa [#allocation6], 0
    %s13 = scalar_lea.sflag [#allocation6], 1
    %14 = vsyncpa %s13, 0
    %15 = vsyncpa [#allocation4], 0
    %s16 = scalar_lea.sflag [#allocation4], 1
    %17 = vsyncpa %s16, 0
    loop: start=0, step=1, limit=8
    $region2: #{tpu_custom_call.1} parent=1 // loop_pre_header
      _
    $region3: #{tpu_custom_call.1} parent=1 // loop_header
      %s19 = sphi 0, %s23
      %p20 = scmp.ge.s32.totalorder %s19, 8
      %s29 = sphi 0, %s31
      %s32 = sphi 0, %s29
      %s33 = sphi 0, %s32
      %s49 = sphi 0, %s33
      %s55 = sphi 0, %s57
      %s58 = sphi 0, %s55
      %s59 = sphi 0, %s58
      %s75 = sphi 0, %s59
      %s79 = sphi 0, %s79
      %s81 = sphi 0, %s79
      %s82 = sphi 0, %s81
      %s96 = sphi 0, %s82
      %s100 = sphi 0, %s100
      %s102 = sphi 0, %s100
      %s103 = sphi 0, %s102
      %s117 = sphi 0, %s103
      %s123 = sphi 0, %s125
      %s126 = sphi 0, %s123
      %s127 = sphi 0, %s126
      %s143 = sphi 0, %s127
    $region4: #{tpu_custom_call.1} parent=1 // loop_header_branch
      %22 = sbr.rel (%p20) target = $region8
    $region5: #{tpu_custom_call.1} parent=1 // loop_body
      %s24 = ssub.s32 %s19, 1
      %s25 = ssub.s32 %s19, 2
      %s26 = sadd.s32 %s19, 1
      %s27 = ssub.s32 %s19, %s26
      %p28 = scmp.eq.s32.totalorder %s27, 0
      %s30 = sadd.s32 %s29, 1
      %s31 = scalar_select %p28, %s29, %s30
      %p34 = pneg %p28
      %p35 = scmp.eq.s32.totalorder %s19, 5
      %p36 = por %p34, %p35
      %p37 = scmp.ne.s32.totalorder %s29, %s32
      %p38 = scmp.eq.s32.totalorder %s19, 0
      %p39 = por %p37, %p38
      %p40 = scmp.ne.s32.totalorder %s29, %s32
      %p41 = scmp.eq.s32.totalorder %s24, 5
      %p42 = por %p40, %p41
      %p43 = scmp.ne.s32.totalorder %s32, %s33
      %p44 = scmp.eq.s32.totalorder %s24, 0
      %p45 = por %p43, %p44
      %p46 = scmp.ne.s32.totalorder %s32, %s33
      %p47 = scmp.eq.s32.totalorder %s25, 5
      %p48 = por %p46, %p47
      %p50 = scmp.ne.s32.totalorder %s33, %s49
      %p51 = scmp.eq.s32.totalorder %s25, 0
      %p52 = por %p50, %p51
      %s53 = ssub.s32 %s19, %s26
      %p54 = scmp.eq.s32.totalorder %s53, 0
      %s56 = sadd.s32 %s55, 1
      %s57 = scalar_select %p54, %s55, %s56
      %p60 = pneg %p54
      %p61 = scmp.eq.s32.totalorder %s19, 5
      %p62 = por %p60, %p61
      %p63 = scmp.ne.s32.totalorder %s55, %s58
      %p64 = scmp.eq.s32.totalorder %s19, 0
      %p65 = por %p63, %p64
      %p66 = scmp.ne.s32.totalorder %s55, %s58
      %p67 = scmp.eq.s32.totalorder %s24, 5
      %p68 = por %p66, %p67
      %p69 = scmp.ne.s32.totalorder %s58, %s59
      %p70 = scmp.eq.s32.totalorder %s24, 0
      %p71 = por %p69, %p70
      %p72 = scmp.ne.s32.totalorder %s58, %s59
      %p73 = scmp.eq.s32.totalorder %s25, 5
      %p74 = por %p72, %p73
      %p76 = scmp.ne.s32.totalorder %s59, %s75
      %p77 = scmp.eq.s32.totalorder %s25, 0
      %p78 = por %p76, %p77
      %s80 = sadd.s32 %s79, 1
      %p83 = scmp.eq.s32.totalorder %s19, 5
      %p84 = scmp.ne.s32.totalorder %s79, %s81
      %p85 = scmp.eq.s32.totalorder %s19, 0
      %p86 = por %p84, %p85
      %p87 = scmp.ne.s32.totalorder %s79, %s81
      %p88 = scmp.eq.s32.totalorder %s24, 5
      %p89 = por %p87, %p88
      %p90 = scmp.ne.s32.totalorder %s81, %s82
      %p91 = scmp.eq.s32.totalorder %s24, 0
      %p92 = por %p90, %p91
      %p93 = scmp.ne.s32.totalorder %s81, %s82
      %p94 = scmp.eq.s32.totalorder %s25, 5
      %p95 = por %p93, %p94
      %p97 = scmp.ne.s32.totalorder %s82, %s96
      %p98 = scmp.eq.s32.totalorder %s25, 0
      %p99 = por %p97, %p98
      %s101 = sadd.s32 %s100, 1
      %p104 = scmp.eq.s32.totalorder %s19, 5
      %p105 = scmp.ne.s32.totalorder %s100, %s102
      %p106 = scmp.eq.s32.totalorder %s19, 0
      %p107 = por %p105, %p106
      %p108 = scmp.ne.s32.totalorder %s100, %s102
      %p109 = scmp.eq.s32.totalorder %s24, 5
      %p110 = por %p108, %p109
      %p111 = scmp.ne.s32.totalorder %s102, %s103
      %p112 = scmp.eq.s32.totalorder %s24, 0
      %p113 = por %p111, %p112
      %p114 = scmp.ne.s32.totalorder %s102, %s103
      %p115 = scmp.eq.s32.totalorder %s25, 5
      %p116 = por %p114, %p115
      %p118 = scmp.ne.s32.totalorder %s103, %s117
      %p119 = scmp.eq.s32.totalorder %s25, 0
      %p120 = por %p118, %p119
      %s121 = ssub.s32 %s19, %s26
      %p122 = scmp.eq.s32.totalorder %s121, 0
      %s124 = sadd.s32 %s123, 1
      %s125 = scalar_select %p122, %s123, %s124
      %p128 = pneg %p122
      %p129 = scmp.eq.s32.totalorder %s19, 5
      %p130 = por %p128, %p129
      %p131 = scmp.ne.s32.totalorder %s123, %s126
      %p132 = scmp.eq.s32.totalorder %s19, 0
      %p133 = por %p131, %p132
      %p134 = scmp.ne.s32.totalorder %s123, %s126
      %p135 = scmp.eq.s32.totalorder %s24, 5
      %p136 = por %p134, %p135
      %p137 = scmp.ne.s32.totalorder %s126, %s127
      %p138 = scmp.eq.s32.totalorder %s24, 0
      %p139 = por %p137, %p138
      %p140 = scmp.ne.s32.totalorder %s126, %s127
      %p141 = scmp.eq.s32.totalorder %s25, 5
      %p142 = por %p140, %p141
      %p144 = scmp.ne.s32.totalorder %s127, %s143
      %p145 = scmp.eq.s32.totalorder %s25, 0
      %p146 = por %p144, %p145
      %p147 = scmp.le.s32.totalorder 1, %s19
      %p148 = scmp.lt.s32.totalorder %s19, 7
      %p149 = pnand %p147, %p148
      %p150 = pneg %p149
      // Predicated region
      $region9: #{tpu_custom_call.1} parent=5 // pred_check
        _
      $region10: #{tpu_custom_call.1} parent=5 // pred_check_branch
        %152 = sbr.rel (%p149) target = $region12
      $region11: #{tpu_custom_call.1} parent=5 // pred_region
        %s153 = ssub.s32 %s19, 1
        // Predicated region
        $region13: #{tpu_custom_call.1} parent=11 // pred_check
          %p154 = pneg %p92
        $region14: #{tpu_custom_call.1} parent=11 // pred_check_branch
          %156 = sbr.rel (%p154) target = $region16
        $region15: #{tpu_custom_call.1} parent=11 // pred_region
          _
        $region16: #{tpu_custom_call.1} parent=11 // pred_fallthru
          _
        // Predicated region
        $region17: #{tpu_custom_call.1} parent=11 // pred_check
          %p157 = pneg %p113
        $region18: #{tpu_custom_call.1} parent=11 // pred_check_branch
          %159 = sbr.rel (%p157) target = $region20
        $region19: #{tpu_custom_call.1} parent=11 // pred_region
          _
        $region20: #{tpu_custom_call.1} parent=11 // pred_fallthru
          _
      $region12: #{tpu_custom_call.1} parent=5 // pred_fallthru
        _
      %p160 = scmp.lt.s32.totalorder %s19, 6
      // Predicated region
      $region21: #{tpu_custom_call.1} parent=5 // pred_check
        %p161 = pneg %p160
      $region22: #{tpu_custom_call.1} parent=5 // pred_check_branch
        %163 = sbr.rel (%p161) target = $region24
      $region23: #{tpu_custom_call.1} parent=5 // pred_region
        // Predicated region
        $region25: #{tpu_custom_call.1} parent=23 // pred_check
          %p164 = pneg %p39
        $region26: #{tpu_custom_call.1} parent=23 // pred_check_branch
          %166 = sbr.rel (%p164) target = $region28
        $region27: #{tpu_custom_call.1} parent=23 // pred_region
          %s167 = sand.u32 %s29, 1
          %s168 = scalar_lea.sflag [#allocation3], %s167
          %s169 = sand.u32 %s29, 1
          %s170 = smul.addr %s169, 16
          %s171 = scalar_lea.vmem [#allocation2], %s170
          %173 = vsyncadd %s168, 0
          %s174 = smul.addr %s19, 2
          %s175 = smul.addr %s174, 8
          %s176 = scalar_lea.hbm %s0, %s175
          %s177 = sshll.u32 %s176, 4
          %s178 = int_to_ptr.hbm [resolvable:$true] %s177
          %s179 = sshll.u32 %s171, 4
          %s180 = int_to_ptr.vmem [resolvable:$true] %s179
          %185 = dma.hbm_to_vmem [thread:$0]  %s178, 256, %s180, %s168, 128, 128, 8
        $region28: #{tpu_custom_call.1} parent=23 // pred_fallthru
          _
        // Predicated region
        $region29: #{tpu_custom_call.1} parent=23 // pred_check
          %p186 = pneg %p65
        $region30: #{tpu_custom_call.1} parent=23 // pred_check_branch
          %188 = sbr.rel (%p186) target = $region32
        $region31: #{tpu_custom_call.1} parent=23 // pred_region
          %s189 = sand.u32 %s55, 1
          %s190 = scalar_lea.sflag [#allocation6], %s189
          %s191 = sand.u32 %s55, 1
          %s192 = smul.addr %s191, 16
          %s193 = scalar_lea.vmem [#allocation5], %s192
          %195 = vsyncadd %s190, 0
          %s196 = smul.addr %s19, 2
          %s197 = smul.addr %s196, 8
          %s198 = scalar_lea.hbm %s1, %s197
          %s199 = sshll.u32 %s198, 4
          %s200 = int_to_ptr.hbm [resolvable:$true] %s199
          %s201 = sshll.u32 %s193, 4
          %s202 = int_to_ptr.vmem [resolvable:$true] %s201
          %207 = dma.hbm_to_vmem [thread:$0]  %s200, 256, %s202, %s190, 128, 128, 8
        $region32: #{tpu_custom_call.1} parent=23 // pred_fallthru
          _
      $region24: #{tpu_custom_call.1} parent=5 // pred_fallthru
        _
      %p208 = scmp.le.s32.totalorder 1, %s19
      %p209 = scmp.lt.s32.totalorder %s19, 7
      %p210 = pnand %p208, %p209
      %p211 = pneg %p210
      // Predicated region
      $region33: #{tpu_custom_call.1} parent=5 // pred_check
        _
      $region34: #{tpu_custom_call.1} parent=5 // pred_check_branch
        %213 = sbr.rel (%p210) target = $region36
      $region35: #{tpu_custom_call.1} parent=5 // pred_region
        %s214 = ssub.s32 %s19, 1
        %s215 = sand.u32 %s32, 1
        %s216 = scalar_lea.sflag [#allocation3], %s215
        %s217 = sand.u32 %s32, 1
        %s218 = smul.addr %s217, 16
        %s219 = scalar_lea.vmem [#allocation2], %s218
        // Predicated region
        $region37: #{tpu_custom_call.1} parent=35 // pred_check
          %p220 = pneg %p45
        $region38: #{tpu_custom_call.1} parent=35 // pred_check_branch
          %222 = sbr.rel (%p220) target = $region40
        $region39: #{tpu_custom_call.1} parent=35 // pred_region
          %224 = dma.done %s216, 256
        $region40: #{tpu_custom_call.1} parent=35 // pred_fallthru
          _
        %s225 = sand.u32 %s58, 1
        %s226 = scalar_lea.sflag [#allocation6], %s225
        %s227 = sand.u32 %s58, 1
        %s228 = smul.addr %s227, 16
        %s229 = scalar_lea.vmem [#allocation5], %s228
        // Predicated region
        $region41: #{tpu_custom_call.1} parent=35 // pred_check
          %p230 = pneg %p71
        $region42: #{tpu_custom_call.1} parent=35 // pred_check_branch
          %232 = sbr.rel (%p230) target = $region44
        $region43: #{tpu_custom_call.1} parent=35 // pred_region
          %234 = dma.done %s226, 256
        $region44: #{tpu_custom_call.1} parent=35 // pred_fallthru
          _
        %s235 = sand.u32 %s32, 1
        %s236 = scalar_lea.sflag [#allocation3], %s235
        %s237 = sand.u32 %s32, 1
        %s238 = smul.addr %s237, 16
        %s239 = scalar_lea.vmem [#allocation2], %s238
        %p240 = pneg %p45
        %p241 = pneg %p42
        %s242 = sand.u32 %s58, 1
        %s243 = scalar_lea.sflag [#allocation6], %s242
        %s244 = sand.u32 %s58, 1
        %s245 = smul.addr %s244, 16
        %s246 = scalar_lea.vmem [#allocation5], %s245
        %p247 = pneg %p71
        %p248 = pneg %p68
        %p249 = pneg %p92
        %p250 = pneg %p89
        %p251 = pneg %p113
        %p252 = pneg %p110
        %p253 = pneg %p139
        %p254 = pneg %p136
        %s255 = sand.u32 %s126, 1
        %s256 = scalar_lea.sflag [#allocation4], %s255
        %s257 = sand.u32 %s126, 1
        %s258 = smul.addr %s257, 8
        %s259 = scalar_lea.vmem [#allocation7], %s258
        %v260 = vld [vmem:[%s219] sm:$0xff]
        %v261 = vld [vmem:[%s219 + $0x8] sm:$0xff]
        %v262 = vld [vmem:[%s229] sm:$0xff]
        %v263 = vld [vmem:[%s229 + $0x8] sm:$0xff]
        %v264 = vld [vmem:[%s2] sm:$0x3f]
        %v265 = vld [vmem:[%s3] sm:$0xff]
        %v266 = vld [vmem:[%s3 + $0x8] sm:$0xff]
        %vm267 = vcmask 130048
        %v269 = vsel %vm267, %v260, 0
        %v272 = vsel %vm267, %v261, 0
        %274 = vmatpush.msra.mxu0 0.0
        %275 = vmatpush.msra.mxu0 0.0
        %276 = vmatpush.msra.mxu0 0.0
        %277 = vmatpush.msra.mxu0 0.0
        %278 = vmatpush.msra.mxu0 0.0
        %279 = vmatpush.msra.mxu0 0.0
        %280 = vmatpush.msra.mxu0 0.0
        %281 = vmatpush.msra.mxu0 0.0
        %282 = vmatpush.msra.mxu0 0.0
        %283 = vmatpush.msra.mxu0 0.0
        %284 = vmatpush.msra.mxu0 0.0
        %285 = vmatpush.msra.mxu0 0.0
        %286 = vmatpush.msra.mxu0 0.0
        %287 = vmatpush.msra.mxu0 0.0
        %288 = vmatpush.msra.mxu0 %v266
        %289 = vmatpush.msra.mxu0 %v265
        %290 = vmatmul.f32.gmra.mxu0 %v269
        %v291 = vpop.f32.mrf.mxu0
        %v292 = vadd.f32 0.0, %v291
        %293 = vmatmul.f32.gmra.mxu0 %v272
        %v294 = vpop.f32.mrf.mxu0
        %v295 = vadd.f32 0.0, %v294
        %296 = vdwg.mxu0
        %v298 = vsel %vm267, %v264, 0
        %300 = vmatpush.msra.mxu0 0.0
        %301 = vmatpush.msra.mxu0 0.0
        %302 = vmatpush.msra.mxu0 0.0
        %303 = vmatpush.msra.mxu0 0.0
        %304 = vmatpush.msra.mxu0 0.0
        %305 = vmatpush.msra.mxu0 0.0
        %306 = vmatpush.msra.mxu0 0.0
        %307 = vmatpush.msra.mxu0 0.0
        %308 = vmatpush.msra.mxu0 0.0
        %309 = vmatpush.msra.mxu0 0.0
        %310 = vmatpush.msra.mxu0 0.0
        %311 = vmatpush.msra.mxu0 0.0
        %312 = vmatpush.msra.mxu0 0.0
        %313 = vmatpush.msra.mxu0 0.0
        %314 = vmatpush.msra.mxu0 %v295
        %315 = vmatpush.msra.mxu0 %v292
        %316 = vmatmul.f32.gmra.mxu0 %v298
        %v317 = vpop.f32.mrf.mxu0
        %v318 = vadd.f32 0.0, %v317
        %319 = vdwg.mxu0
        %v321 = vsel %vm267, %v262, 0
        %v324 = vsel %vm267, %v263, 0
        %326 = vmatpush.msra.mxu0 0.0
        %327 = vmatpush.msra.mxu0 0.0
        %328 = vmatpush.msra.mxu0 0.0
        %329 = vmatpush.msra.mxu0 0.0
        %330 = vmatpush.msra.mxu0 0.0
        %331 = vmatpush.msra.mxu0 0.0
        %332 = vmatpush.msra.mxu0 0.0
        %333 = vmatpush.msra.mxu0 0.0
        %334 = vmatpush.msra.mxu0 0.0
        %335 = vmatpush.msra.mxu0 0.0
        %336 = vmatpush.msra.mxu0 0.0
        %337 = vmatpush.msra.mxu0 0.0
        %338 = vmatpush.msra.mxu0 0.0
        %339 = vmatpush.msra.mxu0 0.0
        %340 = vmatpush.msra.mxu0 %v266
        %341 = vmatpush.msra.mxu0 %v265
        %342 = vmatmul.f32.gmra.mxu0 %v321
        %v343 = vpop.f32.mrf.mxu0
        %v344 = vadd.f32 0.0, %v343
        %345 = vmatmul.f32.gmra.mxu0 %v324
        %v346 = vpop.f32.mrf.mxu0
        %v347 = vadd.f32 0.0, %v346
        %348 = vdwg.mxu0
        %349 = vmatpush.msra.mxu0 0.0
        %350 = vmatpush.msra.mxu0 0.0
        %351 = vmatpush.msra.mxu0 0.0
        %352 = vmatpush.msra.mxu0 0.0
        %353 = vmatpush.msra.mxu0 0.0
        %354 = vmatpush.msra.mxu0 0.0
        %355 = vmatpush.msra.mxu0 0.0
        %356 = vmatpush.msra.mxu0 0.0
        %357 = vmatpush.msra.mxu0 0.0
        %358 = vmatpush.msra.mxu0 0.0
        %359 = vmatpush.msra.mxu0 0.0
        %360 = vmatpush.msra.mxu0 0.0
        %361 = vmatpush.msra.mxu0 0.0
        %362 = vmatpush.msra.mxu0 0.0
        %363 = vmatpush.msra.mxu0 %v347
        %364 = vmatpush.msra.mxu0 %v344
        %365 = vmatmul.f32.gmra.mxu0 %v298
        %v366 = vpop.f32.mrf.mxu0
        %v367 = vadd.f32 0.0, %v366
        %368 = vdwg.mxu0
        %v369 = vmul.f32 %v318, %v318
        %v370 = vmul.f32 %v367, %v367
        %v371 = vmul.f32 %v318, %v367
        %v372 = vmul.f32 %v260, %v260
        %v373 = vmul.f32 %v261, %v261
        %v375 = vsel %vm267, %v372, 0
        %v378 = vsel %vm267, %v373, 0
        %380 = vmatpush.msra.mxu0 0.0
        %381 = vmatpush.msra.mxu0 0.0
        %382 = vmatpush.msra.mxu0 0.0
        %383 = vmatpush.msra.mxu0 0.0
        %384 = vmatpush.msra.mxu0 0.0
        %385 = vmatpush.msra.mxu0 0.0
        %386 = vmatpush.msra.mxu0 0.0
        %387 = vmatpush.msra.mxu0 0.0
        %388 = vmatpush.msra.mxu0 0.0
        %389 = vmatpush.msra.mxu0 0.0
        %390 = vmatpush.msra.mxu0 0.0
        %391 = vmatpush.msra.mxu0 0.0
        %392 = vmatpush.msra.mxu0 0.0
        %393 = vmatpush.msra.mxu0 0.0
        %394 = vmatpush.msra.mxu0 %v266
        %395 = vmatpush.msra.mxu0 %v265
        %396 = vmatmul.f32.gmra.mxu0 %v375
        %v397 = vpop.f32.mrf.mxu0
        %v398 = vadd.f32 0.0, %v397
        %399 = vmatmul.f32.gmra.mxu0 %v378
        %v400 = vpop.f32.mrf.mxu0
        %v401 = vadd.f32 0.0, %v400
        %402 = vdwg.mxu0
        %403 = vmatpush.msra.mxu0 0.0
        %404 = vmatpush.msra.mxu0 0.0
        %405 = vmatpush.msra.mxu0 0.0
        %406 = vmatpush.msra.mxu0 0.0
        %407 = vmatpush.msra.mxu0 0.0
        %408 = vmatpush.msra.mxu0 0.0
        %409 = vmatpush.msra.mxu0 0.0
        %410 = vmatpush.msra.mxu0 0.0
        %411 = vmatpush.msra.mxu0 0.0
        %412 = vmatpush.msra.mxu0 0.0
        %413 = vmatpush.msra.mxu0 0.0
        %414 = vmatpush.msra.mxu0 0.0
        %415 = vmatpush.msra.mxu0 0.0
        %416 = vmatpush.msra.mxu0 0.0
        %417 = vmatpush.msra.mxu0 %v401
        %418 = vmatpush.msra.mxu0 %v398
        %419 = vmatmul.f32.gmra.mxu0 %v298
        %v420 = vpop.f32.mrf.mxu0
        %v421 = vadd.f32 0.0, %v420
        %422 = vdwg.mxu0
        %v423 = vsub.f32 %v421, %v369
        %v424 = vmul.f32 %v262, %v262
        %v425 = vmul.f32 %v263, %v263
        %v427 = vsel %vm267, %v424, 0
        %v430 = vsel %vm267, %v425, 0
        %432 = vmatpush.msra.mxu0 0.0
        %433 = vmatpush.msra.mxu0 0.0
        %434 = vmatpush.msra.mxu0 0.0
        %435 = vmatpush.msra.mxu0 0.0
        %436 = vmatpush.msra.mxu0 0.0
        %437 = vmatpush.msra.mxu0 0.0
        %438 = vmatpush.msra.mxu0 0.0
        %439 = vmatpush.msra.mxu0 0.0
        %440 = vmatpush.msra.mxu0 0.0
        %441 = vmatpush.msra.mxu0 0.0
        %442 = vmatpush.msra.mxu0 0.0
        %443 = vmatpush.msra.mxu0 0.0
        %444 = vmatpush.msra.mxu0 0.0
        %445 = vmatpush.msra.mxu0 0.0
        %446 = vmatpush.msra.mxu0 %v266
        %447 = vmatpush.msra.mxu0 %v265
        %448 = vmatmul.f32.gmra.mxu0 %v427
        %v449 = vpop.f32.mrf.mxu0
        %v450 = vadd.f32 0.0, %v449
        %451 = vmatmul.f32.gmra.mxu0 %v430
        %v452 = vpop.f32.mrf.mxu0
        %v453 = vadd.f32 0.0, %v452
        %454 = vdwg.mxu0
        %455 = vmatpush.msra.mxu0 0.0
        %456 = vmatpush.msra.mxu0 0.0
        %457 = vmatpush.msra.mxu0 0.0
        %458 = vmatpush.msra.mxu0 0.0
        %459 = vmatpush.msra.mxu0 0.0
        %460 = vmatpush.msra.mxu0 0.0
        %461 = vmatpush.msra.mxu0 0.0
        %462 = vmatpush.msra.mxu0 0.0
        %463 = vmatpush.msra.mxu0 0.0
        %464 = vmatpush.msra.mxu0 0.0
        %465 = vmatpush.msra.mxu0 0.0
        %466 = vmatpush.msra.mxu0 0.0
        %467 = vmatpush.msra.mxu0 0.0
        %468 = vmatpush.msra.mxu0 0.0
        %469 = vmatpush.msra.mxu0 %v453
        %470 = vmatpush.msra.mxu0 %v450
        %471 = vmatmul.f32.gmra.mxu0 %v298
        %v472 = vpop.f32.mrf.mxu0
        %v473 = vadd.f32 0.0, %v472
        %474 = vdwg.mxu0
        %v475 = vsub.f32 %v473, %v370
        %v476 = vmul.f32 %v260, %v262
        %v477 = vmul.f32 %v261, %v263
        %v479 = vsel %vm267, %v476, 0
        %v482 = vsel %vm267, %v477, 0
        %484 = vmatpush.msra.mxu0 0.0
        %485 = vmatpush.msra.mxu0 0.0
        %486 = vmatpush.msra.mxu0 0.0
        %487 = vmatpush.msra.mxu0 0.0
        %488 = vmatpush.msra.mxu0 0.0
        %489 = vmatpush.msra.mxu0 0.0
        %490 = vmatpush.msra.mxu0 0.0
        %491 = vmatpush.msra.mxu0 0.0
        %492 = vmatpush.msra.mxu0 0.0
        %493 = vmatpush.msra.mxu0 0.0
        %494 = vmatpush.msra.mxu0 0.0
        %495 = vmatpush.msra.mxu0 0.0
        %496 = vmatpush.msra.mxu0 0.0
        %497 = vmatpush.msra.mxu0 0.0
        %498 = vmatpush.msra.mxu0 %v266
        %499 = vmatpush.msra.mxu0 %v265
        %500 = vmatmul.f32.gmra.mxu0 %v479
        %v501 = vpop.f32.mrf.mxu0
        %v502 = vadd.f32 0.0, %v501
        %503 = vmatmul.f32.gmra.mxu0 %v482
        %v504 = vpop.f32.mrf.mxu0
        %v505 = vadd.f32 0.0, %v504
        %506 = vdwg.mxu0
        %507 = vmatpush.msra.mxu0 0.0
        %508 = vmatpush.msra.mxu0 0.0
        %509 = vmatpush.msra.mxu0 0.0
        %510 = vmatpush.msra.mxu0 0.0
        %511 = vmatpush.msra.mxu0 0.0
        %512 = vmatpush.msra.mxu0 0.0
        %513 = vmatpush.msra.mxu0 0.0
        %514 = vmatpush.msra.mxu0 0.0
        %515 = vmatpush.msra.mxu0 0.0
        %516 = vmatpush.msra.mxu0 0.0
        %517 = vmatpush.msra.mxu0 0.0
        %518 = vmatpush.msra.mxu0 0.0
        %519 = vmatpush.msra.mxu0 0.0
        %520 = vmatpush.msra.mxu0 0.0
        %521 = vmatpush.msra.mxu0 %v505
        %522 = vmatpush.msra.mxu0 %v502
        %523 = vmatmul.f32.gmra.mxu0 %v298
        %v524 = vpop.f32.mrf.mxu0
        %v525 = vadd.f32 0.0, %v524
        %526 = vdwg.mxu0
        %v527 = vsub.f32 %v525, %v371
        %v528 = vmul.f32 %v527, 2.0
        %v529 = vadd.f32 %v528, 0.0009
        %v530 = vadd.f32 %v423, %v475
        %v531 = vadd.f32 %v530, 0.0009
        %v532 = vrcp.pop %v531
        %v533 = vmul.f32 %v531, %v532
        %v534 = vsub.f32 1.0, %v533
        %v535 = vmul.f32 %v532, %v534
        %v536 = vadd.f32 %v532, %v535
        %vm537 = vweird.f32 %v531
        %vm538 = vweird.f32 %v532
        %vm539 = vmor %vm537, %vm538
        %v540 = vsel %vm539, %v532, %v536
        %v541 = vand.u32 2147483647, %v531
        %vm542 = vcmp.eq.f32.partialorder %v541, 8.507059e+37
        %v543 = vand.u32 %v531, 2147483648
        %v544 = vor.u32 1.1754944e-38, %v543
        %v545 = vsel %vm542, %v544, %v540
        %v546 = vmul.f32 %v529, %v545
        %v547 = vmul.f32 %v371, 2.0
        %v548 = vadd.f32 %v547, 0.0001
        %v549 = vadd.f32 %v369, %v370
        %v550 = vadd.f32 %v549, 0.0001
        %v551 = vrcp.pop %v550
        %v552 = vmul.f32 %v550, %v551
        %v553 = vsub.f32 1.0, %v552
        %v554 = vmul.f32 %v551, %v553
        %v555 = vadd.f32 %v551, %v554
        %vm556 = vweird.f32 %v550
        %vm557 = vweird.f32 %v551
        %vm558 = vmor %vm556, %vm557
        %v559 = vsel %vm558, %v551, %v555
        %v560 = vand.u32 2147483647, %v550
        %vm561 = vcmp.eq.f32.partialorder %v560, 8.507059e+37
        %v562 = vand.u32 %v550, 2147483648
        %v563 = vor.u32 1.1754944e-38, %v562
        %v564 = vsel %vm561, %v563, %v559
        %v565 = vmul.f32 %v548, %v564
        %v566 = vmul.f32 %v565, %v546
        %vm567 = vcmask 46080
        %v568 = vsel %vm567, %v566, 0.0
        %569 = vadd.xlane.f32.xlu0 %v568
        %v570 = vpop.xlane.xlu0 %569
        %v571 = vrot.slane %v570, 4
        %v572 = vadd.f32 %v570, %v571
        %v573 = vrot.slane %v572, 2
        %v574 = vadd.f32 %v572, %v573
        %v575 = vrot.slane %v574, 1
        %v576 = vadd.f32 %v574, %v575
        %s577 = vtos %v576
        %s578 = smul.f32 %s577, 0.027777778
        %v579 = vstv %s578
        %580 = vst [vmem:[%s259] sm:$0xff] %v579
        %s581 = sand.u32 %s126, 1
        %s582 = scalar_lea.sflag [#allocation4], %s581
        %s583 = sand.u32 %s126, 1
        %s584 = smul.addr %s583, 8
        %s585 = scalar_lea.vmem [#allocation7], %s584
        // Predicated region
        $region45: #{tpu_custom_call.1} parent=35 // pred_check
          %p586 = pneg %p136
        $region46: #{tpu_custom_call.1} parent=35 // pred_check_branch
          %588 = sbr.rel (%p586) target = $region48
        $region47: #{tpu_custom_call.1} parent=35 // pred_region
          %590 = vsyncadd %s582, 0
          %s591 = smul.addr %s24, 8
          %s592 = scalar_lea.hbm %s4, %s591
          %s594 = sshll.u32 %s585, 4
          %s595 = int_to_ptr.vmem [resolvable:$true] %s594
          %s596 = sshll.u32 %s592, 4
          %s597 = int_to_ptr.hbm [resolvable:$true] %s596
          %599 = dma.vmem_to_hbm [thread:$0]  %s595, 128, %s597, %s582
        $region48: #{tpu_custom_call.1} parent=35 // pred_fallthru
          _
      $region36: #{tpu_custom_call.1} parent=5 // pred_fallthru
        _
      %p600 = scmp.le.s32.totalorder 2, %s19
      // Predicated region
      $region49: #{tpu_custom_call.1} parent=5 // pred_check
        %p601 = pneg %p600
      $region50: #{tpu_custom_call.1} parent=5 // pred_check_branch
        %603 = sbr.rel (%p601) target = $region52
      $region51: #{tpu_custom_call.1} parent=5 // pred_region
        %s604 = ssub.s32 %s19, 2
        // Predicated region
        $region53: #{tpu_custom_call.1} parent=51 // pred_check
          %p605 = pneg %p142
        $region54: #{tpu_custom_call.1} parent=51 // pred_check_branch
          %607 = sbr.rel (%p605) target = $region56
        $region55: #{tpu_custom_call.1} parent=51 // pred_region
          %s608 = sand.u32 %s127, 1
          %s609 = scalar_lea.sflag [#allocation4], %s608
          %s610 = sand.u32 %s127, 1
          %s611 = smul.addr %s610, 8
          %s612 = scalar_lea.vmem [#allocation7], %s611
          %614 = dma.done %s609, 128
        $region56: #{tpu_custom_call.1} parent=51 // pred_fallthru
          _
      $region52: #{tpu_custom_call.1} parent=5 // pred_fallthru
        _
    $region6: #{tpu_custom_call.1} parent=1 // loop_footer
      %s23 = sadd.s32 1, %s19
    $region7: #{tpu_custom_call.1} parent=1 // loop_footer_branch
      %18 = sbr.rel target = $region3
    $region8: #{tpu_custom_call.1} parent=1 // loop_exit
      _
    %615 = vsyncpa [#allocation3], 1
    %s616 = scalar_lea.sflag [#allocation3], 1
    %617 = vsyncpa %s616, 1
    %618 = vsyncpa [#allocation6], 1
    %s619 = scalar_lea.sflag [#allocation6], 1
    %620 = vsyncpa %s619, 1
    %621 = vsyncpa [#allocation4], 1
    %s622 = scalar_lea.sflag [#allocation4], 1
    %623 = vsyncpa %s622, 1

</llo_original>
